<compile_context>
chip_gen: v7x
topology: tpu7x:2x2x1
jax: 0.10.0
libtpu: 0.0.40
codegen_flags: <defaults>
</compile_context>

<pallas_src>
import numpy as np
import jax
import jax.numpy as jnp
from jax.experimental import pallas as pl
from jax.experimental.pallas import tpu as pltpu

_LANE = 128
_SUBLANE = 8


def _round_up(x, m):
    return ((x + m - 1) // m) * m


def _pad_to(a, shape):
    return jnp.pad(a, [(0, t - s) for s, t in zip(a.shape, shape)])


def _batch_tiling(b):
    """Returns (tile_rows, padded_rows) for the batch/sublane axis."""
    if b <= _LANE:
        tb = _round_up(b, _SUBLANE)
        return tb, tb
    return _LANE, _round_up(b, _LANE)


# ----------------------------- kernels --------------------------------------

def _augment_kernel(lhs_ref, ori_ref, w_in_ref, b_in_ref,
                    w_out_ref, b_out_ref, w_proj_ref, b_proj_ref, out_ref):
    """Fused BottleneckBlock + proj head (Linear -> ReLU) for one batch tile.

    lhs = concat([ori, sum(paras)], -1) in bf16: one K=2H matmul replaces the
    ori matmul plus the per-paraphrase matmul loop.  The fused input bias
    (b_in_ori + num_para * b_in_para) is pre-computed wrapper-side.
    """
    x = jnp.dot(lhs_ref[...], w_in_ref[...],
                preferred_element_type=jnp.float32) + b_in_ref[...]
    x = jnp.dot(x.astype(jnp.bfloat16), w_out_ref[...],
                preferred_element_type=jnp.float32) + b_out_ref[...]
    x = jnp.maximum(x, 0.0) + ori_ref[...]            # ReLU + residual, f32
    y = jnp.dot(x.astype(jnp.bfloat16), w_proj_ref[...],
                preferred_element_type=jnp.float32) + b_proj_ref[...]
    out_ref[...] = jnp.maximum(y, 0.0)


def _plain_kernel(x_ref, w_proj_ref, b_proj_ref, out_ref):
    """Non-augmented path: proj head only (Linear -> ReLU)."""
    y = jnp.dot(x_ref[...], w_proj_ref[...],
                preferred_element_type=jnp.float32) + b_proj_ref[...]
    out_ref[...] = jnp.maximum(y, 0.0)


# ----------------------------- wrappers -------------------------------------

@jax.jit
def text_encoder_augment(ori, para, params):
    """ori: (B, H) f32, para: (P, B, H) f32. Returns (B, D) f32."""
    B, H = ori.shape
    P = para.shape[0]
    I = params["w_in_ori"].shape[1]
    D = params["w_proj"].shape[1]
    Hp, Ip, Dp = (_round_up(H, _LANE), _round_up(I, _LANE), _round_up(D, _LANE))
    TB, PB = _batch_tiling(B)

    # --- wrapper-side layout plumbing: lane-dense padding, bf16 weights -----
    para_sum = jnp.sum(para, axis=0)                           # (B, H) f32
    lhs = jnp.concatenate(
        [_pad_to(ori, (PB, Hp)), _pad_to(para_sum, (PB, Hp))],
        axis=-1).astype(jnp.bfloat16)                          # (PB, 2*Hp)
    ori_p = _pad_to(ori, (PB, Hp))                             # f32 residual

    w_in = jnp.concatenate(
        [_pad_to(params["w_in_ori"], (Hp, Ip)),
         _pad_to(params["w_in_para"], (Hp, Ip))],
        axis=0).astype(jnp.bfloat16)                           # (2*Hp, Ip)
    b_in = _pad_to(params["b_in_ori"] + P * params["b_in_para"], (1, Ip))
    w_out = _pad_to(params["w_out"], (Ip, Hp)).astype(jnp.bfloat16)
    b_out = _pad_to(params["b_out"], (1, Hp))
    w_proj = _pad_to(params["w_proj"], (Hp, Dp)).astype(jnp.bfloat16)
    b_proj = _pad_to(params["b_proj"], (1, Dp))

    def row_spec(shape):
        return pl.BlockSpec(shape, lambda i: (i, 0))

    def const_spec(shape):
        return pl.BlockSpec(shape, lambda i: (0, 0))

    out = pl.pallas_call(
        _augment_kernel,
        out_shape=jax.ShapeDtypeStruct((PB, Dp), jnp.float32),
        grid=(PB // TB,),
        in_specs=[
            row_spec((TB, 2 * Hp)),        # fused lhs (bf16)
            row_spec((TB, Hp)),            # ori residual (f32)
            const_spec((2 * Hp, Ip)),      # w_in  (VMEM-resident across grid)
            const_spec((1, Ip)),           # b_in
            const_spec((Ip, Hp)),          # w_out
            const_spec((1, Hp)),           # b_out
            const_spec((Hp, Dp)),          # w_proj
            const_spec((1, Dp)),           # b_proj
        ],
        out_specs=row_spec((TB, Dp)),
        compiler_params=pltpu.CompilerParams(
            dimension_semantics=("parallel",)),
    )(lhs, ori_p, w_in, b_in, w_out, b_out, w_proj, b_proj)
    return out[:B, :D]


@jax.jit
def text_encoder_plain(cls, params):
    """cls: (B, H) f32. Returns (B, D) f32."""
    B, H = cls.shape
    D = params["w_proj"].shape[1]
    Hp, Dp = _round_up(H, _LANE), _round_up(D, _LANE)
    TB, PB = _batch_tiling(B)

    x = _pad_to(cls, (PB, Hp)).astype(jnp.bfloat16)
    w_proj = _pad_to(params["w_proj"], (Hp, Dp)).astype(jnp.bfloat16)
    b_proj = _pad_to(params["b_proj"], (1, Dp))

    out = pl.pallas_call(
        _plain_kernel,
        out_shape=jax.ShapeDtypeStruct((PB, Dp), jnp.float32),
        grid=(PB // TB,),
        in_specs=[
            pl.BlockSpec((TB, Hp), lambda i: (i, 0)),
            pl.BlockSpec((Hp, Dp), lambda i: (0, 0)),
            pl.BlockSpec((1, Dp), lambda i: (0, 0)),
        ],
        out_specs=pl.BlockSpec((TB, Dp), lambda i: (i, 0)),
        compiler_params=pltpu.CompilerParams(
            dimension_semantics=("parallel",)),
    )(x, w_proj, b_proj)
    return out[:B, :D]


def text_encoder_forward(cls_embeds, params, *, training, is_text_augment,
                         augment_thresh, gate_rng=None):
    """cls_embeds: (num_texts, B, H) — CLS embedding per text input.

    The augment/plain gate (torch.rand(1) < thresh) is decided with host-side
    RNG so the branch stays static/jittable — no device->host sync.
    """
    rng = np.random.default_rng(0) if gate_rng is None else gate_rng
    r = float(rng.random())
    if training and is_text_augment and (r < augment_thresh):
        return text_encoder_augment(cls_embeds[0], cls_embeds[1:], params)
    return text_encoder_plain(cls_embeds[0], params)


def init_params(key, hidden, proj_dim):
    inter = hidden // 2
    ks = jax.random.split(key, 8)
    scale = 0.05
    return {
        # BottleneckBlock (weights pre-transposed: y = x @ W + b)
        "w_in_ori":  scale * jax.random.normal(ks[0], (hidden, inter), jnp.float32),
        "b_in_ori":  scale * jax.random.normal(ks[1], (1, inter), jnp.float32),
        "w_in_para": scale * jax.random.normal(ks[2], (hidden, inter), jnp.float32),
        "b_in_para": scale * jax.random.normal(ks[3], (1, inter), jnp.float32),
        "w_out":     scale * jax.random.normal(ks[4], (inter, hidden), jnp.float32),
        "b_out":     scale * jax.random.normal(ks[5], (1, hidden), jnp.float32),
        # proj head
        "w_proj":    scale * jax.random.normal(ks[6], (hidden, proj_dim), jnp.float32),
        "b_proj":    scale * jax.random.normal(ks[7], (1, proj_dim), jnp.float32),
    }


if __name__ == "__main__":
    B, H, D = 2, 32, 32          # batch, model hidden_size, projection_dim
    NUM_TEXTS = 3                # 1 original + 2 paraphrases

    root = jax.random.PRNGKey(0)
    k_embed, k_param = jax.random.split(root, 2)

    # Stand-in for model(**text_inputs)['last_hidden_state'][:, 0, :]
    cls_embeds = jax.random.normal(k_embed, (NUM_TEXTS, B, H), jnp.float32)
    params = init_params(k_param, H, D)

    # Augmented (training) path
    out_aug = text_encoder_forward(
        cls_embeds, params, training=True, is_text_augment=True,
        augment_thresh=1.0, gate_rng=np.random.default_rng(0))
    # Plain path
    out_plain = text_encoder_forward(
        cls_embeds, params, training=False, is_text_augment=True,
        augment_thresh=0.0, gate_rng=np.random.default_rng(0))
    jax.block_until_ready((out_aug, out_plain))

    # Pure-JAX reference with matching bf16 weight/activation quantization.
    bf = lambda a: a.astype(jnp.bfloat16).astype(jnp.float32)

    def ref_aug(e, p):
        ori = e[0]
        ps = jnp.sum(e[1:], axis=0)
        num_para = e.shape[0] - 1
        x = (bf(ori) @ bf(p["w_in_ori"]) + bf(ps) @ bf(p["w_in_para"])
             + p["b_in_ori"] + num_para * p["b_in_para"])
        x = bf(x) @ bf(p["w_out"]) + p["b_out"]
        x = jnp.maximum(x, 0.0) + ori
        return jnp.maximum(bf(x) @ bf(p["w_proj"]) + p["b_proj"], 0.0)

    def ref_plain(e, p):
        return jnp.maximum(bf(e[0]) @ bf(p["w_proj"]) + p["b_proj"], 0.0)

    assert out_aug.shape == (B, D) and out_plain.shape == (B, D)
    assert jnp.allclose(out_aug, ref_aug(cls_embeds, params), atol=2e-3, rtol=2e-3)
    assert jnp.allclose(out_plain, ref_plain(cls_embeds, params), atol=2e-3, rtol=2e-3)

    print("KERNEL_OK")
</pallas_src>

<mosaic_0001>
module attributes {stable_mosaic.version = 11 : i64} {
  func.func @_augment_kernel(%arg0: i32, %arg1: memref<8x256xbf16, #tpu.memory_space<vmem>>, %arg2: memref<8x128xf32, #tpu.memory_space<vmem>>, %arg3: memref<256x128xbf16, #tpu.memory_space<vmem>>, %arg4: memref<1x128xf32, #tpu.memory_space<vmem>>, %arg5: memref<128x128xbf16, #tpu.memory_space<vmem>>, %arg6: memref<1x128xf32, #tpu.memory_space<vmem>>, %arg7: memref<128x128xbf16, #tpu.memory_space<vmem>>, %arg8: memref<1x128xf32, #tpu.memory_space<vmem>>, %arg9: memref<8x128xf32, #tpu.memory_space<vmem>>) attributes {dimension_semantics = [#tpu.dimension_semantics<parallel>], iteration_bounds = array<i64: 1>, scalar_prefetch = 0 : i64, scratch_operands = 0 : i64, tpu.core_type = #tpu.core_type<tc>, window_params = [{transform_indices = @transform_0, window_bounds = array<i64: 8, 256>}, {transform_indices = @transform_1, window_bounds = array<i64: 8, 128>}, {pipeline_mode = #tpu.pipeline_mode<synchronous>, transform_indices = @transform_2, window_bounds = array<i64: 256, 128>}, {pipeline_mode = #tpu.pipeline_mode<synchronous>, transform_indices = @transform_3, window_bounds = array<i64: 1, 128>}, {pipeline_mode = #tpu.pipeline_mode<synchronous>, transform_indices = @transform_4, window_bounds = array<i64: 128, 128>}, {pipeline_mode = #tpu.pipeline_mode<synchronous>, transform_indices = @transform_5, window_bounds = array<i64: 1, 128>}, {pipeline_mode = #tpu.pipeline_mode<synchronous>, transform_indices = @transform_6, window_bounds = array<i64: 128, 128>}, {pipeline_mode = #tpu.pipeline_mode<synchronous>, transform_indices = @transform_7, window_bounds = array<i64: 1, 128>}, {transform_indices = @transform_8, window_bounds = array<i64: 8, 128>}]} {
    %c0 = arith.constant 0 : index
    %c0_0 = arith.constant 0 : index
    %0 = vector.load %arg1[%c0, %c0_0] : memref<8x256xbf16, #tpu.memory_space<vmem>>, vector<8x256xbf16>
    %c0_1 = arith.constant 0 : index
    %c0_2 = arith.constant 0 : index
    %1 = vector.load %arg3[%c0_1, %c0_2] : memref<256x128xbf16, #tpu.memory_space<vmem>>, vector<256x128xbf16>
    %cst = arith.constant dense<0.000000e+00> : vector<8x128xf32>
    %2 = tpu.matmul %0, %1, %cst {dimension_numbers = #tpu.dot_dimension_numbers<[1], [0], [0], [1], [0, 0, 1, 1], [], []>} : vector<8x256xbf16>, vector<256x128xbf16>, vector<8x128xf32> -> vector<8x128xf32>
    %c0_3 = arith.constant 0 : index
    %c0_4 = arith.constant 0 : index
    %3 = vector.load %arg4[%c0_3, %c0_4] : memref<1x128xf32, #tpu.memory_space<vmem>>, vector<1x128xf32>
    %4 = vector.broadcast %3 : vector<1x128xf32> to vector<8x128xf32>
    %5 = arith.addf %2, %4 : vector<8x128xf32>
    %6 = arith.truncf %5 : vector<8x128xf32> to vector<8x128xbf16>
    %c0_5 = arith.constant 0 : index
    %c0_6 = arith.constant 0 : index
    %7 = vector.load %arg5[%c0_5, %c0_6] : memref<128x128xbf16, #tpu.memory_space<vmem>>, vector<128x128xbf16>
    %cst_7 = arith.constant dense<0.000000e+00> : vector<8x128xf32>
    %8 = tpu.matmul %6, %7, %cst_7 {dimension_numbers = #tpu.dot_dimension_numbers<[1], [0], [0], [1], [0, 0, 1, 1], [], []>} : vector<8x128xbf16>, vector<128x128xbf16>, vector<8x128xf32> -> vector<8x128xf32>
    %c0_8 = arith.constant 0 : index
    %c0_9 = arith.constant 0 : index
    %9 = vector.load %arg6[%c0_8, %c0_9] : memref<1x128xf32, #tpu.memory_space<vmem>>, vector<1x128xf32>
    %10 = vector.broadcast %9 : vector<1x128xf32> to vector<8x128xf32>
    %11 = arith.addf %8, %10 : vector<8x128xf32>
    %cst_10 = arith.constant 0.000000e+00 : f32
    %12 = vector.broadcast %cst_10 : f32 to vector<8x128xf32>
    %13 = arith.maximumf %11, %12 : vector<8x128xf32>
    %c0_11 = arith.constant 0 : index
    %c0_12 = arith.constant 0 : index
    %14 = vector.load %arg2[%c0_11, %c0_12] : memref<8x128xf32, #tpu.memory_space<vmem>>, vector<8x128xf32>
    %15 = arith.addf %13, %14 : vector<8x128xf32>
    %16 = arith.truncf %15 : vector<8x128xf32> to vector<8x128xbf16>
    %c0_13 = arith.constant 0 : index
    %c0_14 = arith.constant 0 : index
    %17 = vector.load %arg7[%c0_13, %c0_14] : memref<128x128xbf16, #tpu.memory_space<vmem>>, vector<128x128xbf16>
    %cst_15 = arith.constant dense<0.000000e+00> : vector<8x128xf32>
    %18 = tpu.matmul %16, %17, %cst_15 {dimension_numbers = #tpu.dot_dimension_numbers<[1], [0], [0], [1], [0, 0, 1, 1], [], []>} : vector<8x128xbf16>, vector<128x128xbf16>, vector<8x128xf32> -> vector<8x128xf32>
    %c0_16 = arith.constant 0 : index
    %c0_17 = arith.constant 0 : index
    %19 = vector.load %arg8[%c0_16, %c0_17] : memref<1x128xf32, #tpu.memory_space<vmem>>, vector<1x128xf32>
    %20 = vector.broadcast %19 : vector<1x128xf32> to vector<8x128xf32>
    %21 = arith.addf %18, %20 : vector<8x128xf32>
    %cst_18 = arith.constant 0.000000e+00 : f32
    %22 = vector.broadcast %cst_18 : f32 to vector<8x128xf32>
    %23 = arith.maximumf %21, %22 : vector<8x128xf32>
    %c0_19 = arith.constant 0 : index
    %c0_20 = arith.constant 0 : index
    %24 = vector.load %arg9[%c0_19, %c0_20] : memref<8x128xf32, #tpu.memory_space<vmem>>, vector<8x128xf32>
    tpu.vector_store %arg9[%c0_19, %c0_20], %23 {strides = array<i32>} : memref<8x128xf32, #tpu.memory_space<vmem>>, vector<8x128xf32>,
    return
  }
  func.func @transform_0(%arg0: i32) -> (i32, i32) {
    %c0_i32 = arith.constant 0 : i32
    %c0_i32_0 = arith.constant 0 : i32
    return %arg0, %c0_i32 : i32, i32
  }
  func.func @transform_1(%arg0: i32) -> (i32, i32) {
    %c0_i32 = arith.constant 0 : i32
    %c0_i32_0 = arith.constant 0 : i32
    return %arg0, %c0_i32 : i32, i32
  }
  func.func @transform_2(%arg0: i32) -> (i32, i32) {
    %c0_i32 = arith.constant 0 : i32
    %c0_i32_0 = arith.constant 0 : i32
    %c0_i32_1 = arith.constant 0 : i32
    return %c0_i32, %c0_i32_0 : i32, i32
  }
  func.func @transform_3(%arg0: i32) -> (i32, i32) {
    %c0_i32 = arith.constant 0 : i32
    %c0_i32_0 = arith.constant 0 : i32
    %c0_i32_1 = arith.constant 0 : i32
    return %c0_i32, %c0_i32_0 : i32, i32
  }
  func.func @transform_4(%arg0: i32) -> (i32, i32) {
    %c0_i32 = arith.constant 0 : i32
    %c0_i32_0 = arith.constant 0 : i32
    %c0_i32_1 = arith.constant 0 : i32
    return %c0_i32, %c0_i32_0 : i32, i32
  }
  func.func @transform_5(%arg0: i32) -> (i32, i32) {
    %c0_i32 = arith.constant 0 : i32
    %c0_i32_0 = arith.constant 0 : i32
    %c0_i32_1 = arith.constant 0 : i32
    return %c0_i32, %c0_i32_0 : i32, i32
  }
  func.func @transform_6(%arg0: i32) -> (i32, i32) {
    %c0_i32 = arith.constant 0 : i32
    %c0_i32_0 = arith.constant 0 : i32
    %c0_i32_1 = arith.constant 0 : i32
    return %c0_i32, %c0_i32_0 : i32, i32
  }
  func.func @transform_7(%arg0: i32) -> (i32, i32) {
    %c0_i32 = arith.constant 0 : i32
    %c0_i32_0 = arith.constant 0 : i32
    %c0_i32_1 = arith.constant 0 : i32
    return %c0_i32, %c0_i32_0 : i32, i32
  }
  func.func @transform_8(%arg0: i32) -> (i32, i32) {
    %c0_i32 = arith.constant 0 : i32
    %c0_i32_0 = arith.constant 0 : i32
    return %arg0, %c0_i32 : i32, i32
  }
}

</mosaic_0001>

<llo_original>
// kernel: text_encoder_augment.1
$region0: #{text_encoder_augment.1}
  #allocation0 [shape = 'u32[]', space=smem, size = 0x4, offset = 0x4, fixed_abs, tag = 'smem constant byte address 0x4 - core index']
  #allocation1 [shape = 'u32[144,128]{1,0:T(1,128)}', space=vmem, size = 0x12000, scoped, tag = 'internal scratch']
  %s0 = inlined_call_operand.vmem [shape: bf16[8,256], index: 0, kind: input, shape index: {}]
  %s1 = inlined_call_operand.vmem [shape: f32[8,128], index: 1, kind: input, shape index: {}]
  %s2 = inlined_call_operand.vmem [shape: bf16[256,128], index: 2, kind: input, shape index: {}]
  %s3 = inlined_call_operand.vmem [shape: f32[1,128], index: 3, kind: input, shape index: {}]
  %s4 = inlined_call_operand.vmem [shape: bf16[128,128], index: 4, kind: input, shape index: {}]
  %s5 = inlined_call_operand.vmem [shape: f32[1,128], index: 5, kind: input, shape index: {}]
  %s6 = inlined_call_operand.vmem [shape: bf16[128,128], index: 6, kind: input, shape index: {}]
  %s7 = inlined_call_operand.vmem [shape: f32[1,128], index: 7, kind: input, shape index: {}]
  %s8 = inlined_call_operand.vmem [shape: f32[8,128], index: 8, kind: output, shape index: {}]
  %s9 = sld [smem:[#allocation0]]
  $region42: #{text_encoder_augment.1} parent=0
    _
  %s11 = ssub.s32 1, %s9
  %s12 = scalar_select 0, %s11, %s9
  // Predicated region
  $region2: #{text_encoder_augment.1} parent=0 // pred_check
    _
  $region3: #{text_encoder_augment.1} parent=0 // pred_check_branch
    %14 = sbr.rel (0) target = $region5
  $region4: #{text_encoder_augment.1} parent=0 // pred_region
    _
  $region5: #{text_encoder_augment.1} parent=0 // pred_fallthru
    _
  // Predicated region
  $region6: #{text_encoder_augment.1} parent=0 // pred_check
    _
  $region7: #{text_encoder_augment.1} parent=0 // pred_check_branch
    %16 = sbr.rel (0) target = $region9
  $region8: #{text_encoder_augment.1} parent=0 // pred_region
    _
  $region9: #{text_encoder_augment.1} parent=0 // pred_fallthru
    _
  // Predicated region
  $region10: #{text_encoder_augment.1} parent=0 // pred_check
    _
  $region11: #{text_encoder_augment.1} parent=0 // pred_check_branch
    %18 = sbr.rel (0) target = $region13
  $region12: #{text_encoder_augment.1} parent=0 // pred_region
    _
  $region13: #{text_encoder_augment.1} parent=0 // pred_fallthru
    _
  // Predicated region
  $region14: #{text_encoder_augment.1} parent=0 // pred_check
    _
  $region15: #{text_encoder_augment.1} parent=0 // pred_check_branch
    %20 = sbr.rel (0) target = $region17
  $region16: #{text_encoder_augment.1} parent=0 // pred_region
    _
  $region17: #{text_encoder_augment.1} parent=0 // pred_fallthru
    _
  // Predicated region
  $region18: #{text_encoder_augment.1} parent=0 // pred_check
    _
  $region19: #{text_encoder_augment.1} parent=0 // pred_check_branch
    %22 = sbr.rel (0) target = $region21
  $region20: #{text_encoder_augment.1} parent=0 // pred_region
    _
  $region21: #{text_encoder_augment.1} parent=0 // pred_fallthru
    _
  // Predicated region
  $region22: #{text_encoder_augment.1} parent=0 // pred_check
    _
  $region23: #{text_encoder_augment.1} parent=0 // pred_check_branch
    %24 = sbr.rel (0) target = $region25
  $region24: #{text_encoder_augment.1} parent=0 // pred_region
    _
  $region25: #{text_encoder_augment.1} parent=0 // pred_fallthru
    _
  // Predicated region
  $region26: #{text_encoder_augment.1} parent=0 // pred_check
    _
  $region27: #{text_encoder_augment.1} parent=0 // pred_check_branch
    %26 = sbr.rel (0) target = $region29
  $region28: #{text_encoder_augment.1} parent=0 // pred_region
    _
  $region29: #{text_encoder_augment.1} parent=0 // pred_fallthru
    _
  // Predicated region
  $region30: #{text_encoder_augment.1} parent=0 // pred_check
    _
  $region31: #{text_encoder_augment.1} parent=0 // pred_check_branch
    %28 = sbr.rel (0) target = $region33
  $region32: #{text_encoder_augment.1} parent=0 // pred_region
    _
  $region33: #{text_encoder_augment.1} parent=0 // pred_fallthru
    _
  %v30 = vld [vmem:[%s0] sm:$0xff]
  %v31 = vld [vmem:[%s2] sm:$0xf]
  %v32 = vld [vmem:[%s2 + $0x4] sm:$0xf]
  %v33 = vld [vmem:[%s2 + $0x8] sm:$0xf]
  %v34 = vld [vmem:[%s2 + $0xc] sm:$0xf]
  %v35 = vld [vmem:[%s2 + $0x10] sm:$0xf]
  %v36 = vld [vmem:[%s2 + $0x14] sm:$0xf]
  %v37 = vld [vmem:[%s2 + $0x18] sm:$0xf]
  %v38 = vld [vmem:[%s2 + $0x1c] sm:$0xf]
  %v39 = vld [vmem:[%s2 + $0x20] sm:$0xf]
  %v40 = vld [vmem:[%s2 + $0x24] sm:$0xf]
  %v41 = vld [vmem:[%s2 + $0x28] sm:$0xf]
  %v42 = vld [vmem:[%s2 + $0x2c] sm:$0xf]
  %v43 = vld [vmem:[%s2 + $0x30] sm:$0xf]
  %v44 = vld [vmem:[%s2 + $0x34] sm:$0xf]
  %v45 = vld [vmem:[%s2 + $0x38] sm:$0xf]
  %v46 = vld [vmem:[%s2 + $0x3c] sm:$0xf]
  %v47 = vld [vmem:[%s2 + $0x40] sm:$0xf]
  %v48 = vld [vmem:[%s2 + $0x44] sm:$0xf]
  %v49 = vld [vmem:[%s2 + $0x48] sm:$0xf]
  %v50 = vld [vmem:[%s2 + $0x4c] sm:$0xf]
  %v51 = vld [vmem:[%s2 + $0x50] sm:$0xf]
  %v52 = vld [vmem:[%s2 + $0x54] sm:$0xf]
  %v53 = vld [vmem:[%s2 + $0x58] sm:$0xf]
  %v54 = vld [vmem:[%s2 + $0x5c] sm:$0xf]
  %v55 = vld [vmem:[%s2 + $0x60] sm:$0xf]
  %v56 = vld [vmem:[%s2 + $0x64] sm:$0xf]
  %v57 = vld [vmem:[%s2 + $0x68] sm:$0xf]
  %v58 = vld [vmem:[%s2 + $0x6c] sm:$0xf]
  %v59 = vld [vmem:[%s2 + $0x70] sm:$0xf]
  %v60 = vld [vmem:[%s2 + $0x74] sm:$0xf]
  %v61 = vld [vmem:[%s2 + $0x78] sm:$0xf]
  %v62 = vld [vmem:[%s2 + $0x7c] sm:$0xf]
  %v63 = vld [vmem:[%s3] sm:$0x1]
  %v65 = vlaneseq
  %v66 = vshrl.u32 %v65, 7
  %v67 = vsub.s32 0, %v66
  %v68 = vrot.slane %v63, %v67
  %v71 = vunpack.c.l.b16 %v30
  %v72 = vunpack.c.h.b16 %v30
  %v73 = vpack.c.b16 %v71, %v71
  %v74 = vpack.c.b16 %v72, %v72
  %v109 = vunpack.c.l.b16 %v31
  %v110 = vunpack.c.l.b16 %v32
  %v111 = vunpack.c.l.b16 %v33
  %v112 = vunpack.c.l.b16 %v34
  %v113 = vunpack.c.l.b16 %v35
  %v114 = vunpack.c.l.b16 %v36
  %v115 = vunpack.c.l.b16 %v37
  %v116 = vunpack.c.l.b16 %v38
  %v117 = vunpack.c.l.b16 %v39
  %v118 = vunpack.c.l.b16 %v40
  %v119 = vunpack.c.l.b16 %v41
  %v120 = vunpack.c.l.b16 %v42
  %v121 = vunpack.c.l.b16 %v43
  %v122 = vunpack.c.l.b16 %v44
  %v123 = vunpack.c.l.b16 %v45
  %v124 = vunpack.c.l.b16 %v46
  %v125 = vunpack.c.l.b16 %v47
  %v126 = vunpack.c.l.b16 %v48
  %v127 = vunpack.c.l.b16 %v49
  %v128 = vunpack.c.l.b16 %v50
  %v129 = vunpack.c.l.b16 %v51
  %v130 = vunpack.c.l.b16 %v52
  %v131 = vunpack.c.l.b16 %v53
  %v132 = vunpack.c.l.b16 %v54
  %v133 = vunpack.c.l.b16 %v55
  %v134 = vunpack.c.l.b16 %v56
  %v135 = vunpack.c.l.b16 %v57
  %v136 = vunpack.c.l.b16 %v58
  %v137 = vunpack.c.l.b16 %v59
  %v138 = vunpack.c.l.b16 %v60
  %v139 = vunpack.c.l.b16 %v61
  %v140 = vunpack.c.l.b16 %v62
  %v141 = vpack.c.b16 %v110, %v109
  %v142 = vpack.c.b16 %v112, %v111
  %v143 = vpack.c.b16 %v114, %v113
  %v144 = vpack.c.b16 %v116, %v115
  %v145 = vpack.c.b16 %v118, %v117
  %v146 = vpack.c.b16 %v120, %v119
  %v147 = vpack.c.b16 %v122, %v121
  %v148 = vpack.c.b16 %v124, %v123
  %v149 = vpack.c.b16 %v126, %v125
  %v150 = vpack.c.b16 %v128, %v127
  %v151 = vpack.c.b16 %v130, %v129
  %v152 = vpack.c.b16 %v132, %v131
  %v153 = vpack.c.b16 %v134, %v133
  %v154 = vpack.c.b16 %v136, %v135
  %v155 = vpack.c.b16 %v138, %v137
  %v156 = vpack.c.b16 %v140, %v139
  %173 = vmatprep.subr.bf16.mxu0 0
  %174 = vmatpush1.bf16.msra.mxu0 %v141
  %175 = vmatprep.subr.bf16.mxu0 0
  %176 = vmatpush1.bf16.msra.mxu0 %v142
  %177 = vmatprep.subr.bf16.mxu0 0
  %178 = vmatpush1.bf16.msra.mxu0 %v143
  %179 = vmatprep.subr.bf16.mxu0 0
  %180 = vmatpush1.bf16.msra.mxu0 %v144
  %181 = vmatprep.subr.bf16.mxu0 0
  %182 = vmatpush1.bf16.msra.mxu0 %v145
  %183 = vmatprep.subr.bf16.mxu0 0
  %184 = vmatpush1.bf16.msra.mxu0 %v146
  %185 = vmatprep.subr.bf16.mxu0 0
  %186 = vmatpush1.bf16.msra.mxu0 %v147
  %187 = vmatprep.subr.bf16.mxu0 0
  %188 = vmatpush1.bf16.msra.mxu0 %v148
  %189 = vmatprep.subr.bf16.mxu0 0
  %190 = vmatpush1.bf16.msra.mxu0 %v149
  %191 = vmatprep.subr.bf16.mxu0 0
  %192 = vmatpush1.bf16.msra.mxu0 %v150
  %193 = vmatprep.subr.bf16.mxu0 0
  %194 = vmatpush1.bf16.msra.mxu0 %v151
  %195 = vmatprep.subr.bf16.mxu0 0
  %196 = vmatpush1.bf16.msra.mxu0 %v152
  %197 = vmatprep.subr.bf16.mxu0 0
  %198 = vmatpush1.bf16.msra.mxu0 %v153
  %199 = vmatprep.subr.bf16.mxu0 0
  %200 = vmatpush1.bf16.msra.mxu0 %v154
  %201 = vmatprep.subr.bf16.mxu0 0
  %202 = vmatpush1.bf16.msra.mxu0 %v155
  %203 = vmatprep.subr.bf16.mxu0 0
  %204 = vmatpush1.bf16.msra.mxu0 %v156
  %205 = vmatprep.mubr.bf16.mxu0 %v74
  %206 = vmatmul.mubr.bf16.gmra.mrb[0].mxu0 %v73
  %v207 = vpop.f32.mrb[0].mxu0
  %v208 = vadd.f32 %v68, %v207
  %v209 = vpop.f32.mrb[0].mxu0
  %v210 = vpop.f32.mrb[0].mxu0
  %v211 = vpop.f32.mrb[0].mxu0
  %212 = vdwg.mxu0
  %v213 = vpack.c.bf16 %v208, %v208
  %v214 = vld [vmem:[%s4] sm:$0xf]
  %v215 = vld [vmem:[%s4 + $0x4] sm:$0xf]
  %v216 = vld [vmem:[%s4 + $0x8] sm:$0xf]
  %v217 = vld [vmem:[%s4 + $0xc] sm:$0xf]
  %v218 = vld [vmem:[%s4 + $0x10] sm:$0xf]
  %v219 = vld [vmem:[%s4 + $0x14] sm:$0xf]
  %v220 = vld [vmem:[%s4 + $0x18] sm:$0xf]
  %v221 = vld [vmem:[%s4 + $0x1c] sm:$0xf]
  %v222 = vld [vmem:[%s4 + $0x20] sm:$0xf]
  %v223 = vld [vmem:[%s4 + $0x24] sm:$0xf]
  %v224 = vld [vmem:[%s4 + $0x28] sm:$0xf]
  %v225 = vld [vmem:[%s4 + $0x2c] sm:$0xf]
  %v226 = vld [vmem:[%s4 + $0x30] sm:$0xf]
  %v227 = vld [vmem:[%s4 + $0x34] sm:$0xf]
  %v228 = vld [vmem:[%s4 + $0x38] sm:$0xf]
  %v229 = vld [vmem:[%s4 + $0x3c] sm:$0xf]
  %v230 = vld [vmem:[%s5] sm:$0x1]
  %v232 = vlaneseq
  %v233 = vshrl.u32 %v232, 7
  %v234 = vsub.s32 0, %v233
  %v235 = vrot.slane %v230, %v234
  %v253 = vunpack.c.l.b16 %v214
  %v254 = vunpack.c.l.b16 %v215
  %v255 = vunpack.c.l.b16 %v216
  %v256 = vunpack.c.l.b16 %v217
  %v257 = vunpack.c.l.b16 %v218
  %v258 = vunpack.c.l.b16 %v219
  %v259 = vunpack.c.l.b16 %v220
  %v260 = vunpack.c.l.b16 %v221
  %v261 = vunpack.c.l.b16 %v222
  %v262 = vunpack.c.l.b16 %v223
  %v263 = vunpack.c.l.b16 %v224
  %v264 = vunpack.c.l.b16 %v225
  %v265 = vunpack.c.l.b16 %v226
  %v266 = vunpack.c.l.b16 %v227
  %v267 = vunpack.c.l.b16 %v228
  %v268 = vunpack.c.l.b16 %v229
  %v269 = vpack.c.b16 %v254, %v253
  %v270 = vpack.c.b16 %v256, %v255
  %v271 = vpack.c.b16 %v258, %v257
  %v272 = vpack.c.b16 %v260, %v259
  %v273 = vpack.c.b16 %v262, %v261
  %v274 = vpack.c.b16 %v264, %v263
  %v275 = vpack.c.b16 %v266, %v265
  %v276 = vpack.c.b16 %v268, %v267
  %285 = vmatprep.subr.bf16.mxu0 0
  %286 = vmatpush1.bf16.msra.mxu0 %v269
  %287 = vmatprep.subr.bf16.mxu0 0
  %288 = vmatpush1.bf16.msra.mxu0 %v270
  %289 = vmatprep.subr.bf16.mxu0 0
  %290 = vmatpush1.bf16.msra.mxu0 %v271
  %291 = vmatprep.subr.bf16.mxu0 0
  %292 = vmatpush1.bf16.msra.mxu0 %v272
  %293 = vmatprep.subr.bf16.mxu0 0
  %294 = vmatpush1.bf16.msra.mxu0 %v273
  %295 = vmatprep.subr.bf16.mxu0 0
  %296 = vmatpush1.bf16.msra.mxu0 %v274
  %297 = vmatprep.subr.bf16.mxu0 0
  %298 = vmatpush1.bf16.msra.mxu0 %v275
  %299 = vmatprep.subr.bf16.mxu0 0
  %300 = vmatpush1.bf16.msra.mxu0 %v276
  %301 = vmatprep.subr.bf16.mxu0 0
  %302 = vmatpush1.bf16.msra.mxu0 0
  %303 = vmatprep.subr.bf16.mxu0 0
  %304 = vmatpush1.bf16.msra.mxu0 0
  %305 = vmatprep.subr.bf16.mxu0 0
  %306 = vmatpush1.bf16.msra.mxu0 0
  %307 = vmatprep.subr.bf16.mxu0 0
  %308 = vmatpush1.bf16.msra.mxu0 0
  %309 = vmatprep.subr.bf16.mxu0 0
  %310 = vmatpush1.bf16.msra.mxu0 0
  %311 = vmatprep.subr.bf16.mxu0 0
  %312 = vmatpush1.bf16.msra.mxu0 0
  %313 = vmatprep.subr.bf16.mxu0 0
  %314 = vmatpush1.bf16.msra.mxu0 0
  %315 = vmatprep.subr.bf16.mxu0 0
  %316 = vmatpush1.bf16.msra.mxu0 0
  %317 = vmatprep.mubr.bf16.mxu0 0
  %318 = vmatmul.mubr.bf16.gmra.mrb[0].mxu0 %v213
  %v319 = vpop.f32.mrb[0].mxu0
  %v320 = vadd.f32 %v235, %v319
  %v321 = vpop.f32.mrb[0].mxu0
  %v322 = vpop.f32.mrb[0].mxu0
  %v323 = vpop.f32.mrb[0].mxu0
  %324 = vdwg.mxu0
  %v325 = vmax.f32 %v320, 0.0
  %v326 = vld [vmem:[%s1] sm:$0xff]
  %v327 = vadd.f32 %v325, %v326
  %v328 = vpack.c.bf16 %v327, %v327
  %v329 = vld [vmem:[%s6] sm:$0xf]
  %v330 = vld [vmem:[%s6 + $0x4] sm:$0xf]
  %v331 = vld [vmem:[%s6 + $0x8] sm:$0xf]
  %v332 = vld [vmem:[%s6 + $0xc] sm:$0xf]
  %v333 = vld [vmem:[%s6 + $0x10] sm:$0xf]
  %v334 = vld [vmem:[%s6 + $0x14] sm:$0xf]
  %v335 = vld [vmem:[%s6 + $0x18] sm:$0xf]
  %v336 = vld [vmem:[%s6 + $0x1c] sm:$0xf]
  %v337 = vld [vmem:[%s6 + $0x20] sm:$0xf]
  %v338 = vld [vmem:[%s6 + $0x24] sm:$0xf]
  %v339 = vld [vmem:[%s6 + $0x28] sm:$0xf]
  %v340 = vld [vmem:[%s6 + $0x2c] sm:$0xf]
  %v341 = vld [vmem:[%s6 + $0x30] sm:$0xf]
  %v342 = vld [vmem:[%s6 + $0x34] sm:$0xf]
  %v343 = vld [vmem:[%s6 + $0x38] sm:$0xf]
  %v344 = vld [vmem:[%s6 + $0x3c] sm:$0xf]
  %v345 = vld [vmem:[%s7] sm:$0x1]
  %v347 = vlaneseq
  %v348 = vshrl.u32 %v347, 7
  %v349 = vsub.s32 0, %v348
  %v350 = vrot.slane %v345, %v349
  %v368 = vunpack.c.l.b16 %v329
  %v369 = vunpack.c.l.b16 %v330
  %v370 = vunpack.c.l.b16 %v331
  %v371 = vunpack.c.l.b16 %v332
  %v372 = vunpack.c.l.b16 %v333
  %v373 = vunpack.c.l.b16 %v334
  %v374 = vunpack.c.l.b16 %v335
  %v375 = vunpack.c.l.b16 %v336
  %v376 = vunpack.c.l.b16 %v337
  %v377 = vunpack.c.l.b16 %v338
  %v378 = vunpack.c.l.b16 %v339
  %v379 = vunpack.c.l.b16 %v340
  %v380 = vunpack.c.l.b16 %v341
  %v381 = vunpack.c.l.b16 %v342
  %v382 = vunpack.c.l.b16 %v343
  %v383 = vunpack.c.l.b16 %v344
  %v384 = vpack.c.b16 %v369, %v368
  %v385 = vpack.c.b16 %v371, %v370
  %v386 = vpack.c.b16 %v373, %v372
  %v387 = vpack.c.b16 %v375, %v374
  %v388 = vpack.c.b16 %v377, %v376
  %v389 = vpack.c.b16 %v379, %v378
  %v390 = vpack.c.b16 %v381, %v380
  %v391 = vpack.c.b16 %v383, %v382
  %400 = vmatprep.subr.bf16.mxu0 0
  %401 = vmatpush1.bf16.msra.mxu0 %v384
  %402 = vmatprep.subr.bf16.mxu0 0
  %403 = vmatpush1.bf16.msra.mxu0 %v385
  %404 = vmatprep.subr.bf16.mxu0 0
  %405 = vmatpush1.bf16.msra.mxu0 %v386
  %406 = vmatprep.subr.bf16.mxu0 0
  %407 = vmatpush1.bf16.msra.mxu0 %v387
  %408 = vmatprep.subr.bf16.mxu0 0
  %409 = vmatpush1.bf16.msra.mxu0 %v388
  %410 = vmatprep.subr.bf16.mxu0 0
  %411 = vmatpush1.bf16.msra.mxu0 %v389
  %412 = vmatprep.subr.bf16.mxu0 0
  %413 = vmatpush1.bf16.msra.mxu0 %v390
  %414 = vmatprep.subr.bf16.mxu0 0
  %415 = vmatpush1.bf16.msra.mxu0 %v391
  %416 = vmatprep.subr.bf16.mxu0 0
  %417 = vmatpush1.bf16.msra.mxu0 0
  %418 = vmatprep.subr.bf16.mxu0 0
  %419 = vmatpush1.bf16.msra.mxu0 0
  %420 = vmatprep.subr.bf16.mxu0 0
  %421 = vmatpush1.bf16.msra.mxu0 0
  %422 = vmatprep.subr.bf16.mxu0 0
  %423 = vmatpush1.bf16.msra.mxu0 0
  %424 = vmatprep.subr.bf16.mxu0 0
  %425 = vmatpush1.bf16.msra.mxu0 0
  %426 = vmatprep.subr.bf16.mxu0 0
  %427 = vmatpush1.bf16.msra.mxu0 0
  %428 = vmatprep.subr.bf16.mxu0 0
  %429 = vmatpush1.bf16.msra.mxu0 0
  %430 = vmatprep.subr.bf16.mxu0 0
  %431 = vmatpush1.bf16.msra.mxu0 0
  %432 = vmatprep.mubr.bf16.mxu0 0
  %433 = vmatmul.mubr.bf16.gmra.mrb[0].mxu0 %v328
  %v434 = vpop.f32.mrb[0].mxu0
  %v435 = vadd.f32 %v350, %v434
  %v436 = vpop.f32.mrb[0].mxu0
  %v437 = vpop.f32.mrb[0].mxu0
  %v438 = vpop.f32.mrb[0].mxu0
  %439 = vdwg.mxu0
  %v440 = vmax.f32 %v435, 0.0
  %441 = vst [vmem:[%s8] sm:$0xff] %v440
  // Predicated region
  $region34: #{text_encoder_augment.1} parent=0 // pred_check
    _
  $region35: #{text_encoder_augment.1} parent=0 // pred_check_branch
    %443 = sbr.rel (0) target = $region37
  $region36: #{text_encoder_augment.1} parent=0 // pred_region
    _
  $region37: #{text_encoder_augment.1} parent=0 // pred_fallthru
    _
  // Predicated region
  $region38: #{text_encoder_augment.1} parent=0 // pred_check
    _
  $region39: #{text_encoder_augment.1} parent=0 // pred_check_branch
    %445 = sbr.rel (0) target = $region41
  $region40: #{text_encoder_augment.1} parent=0 // pred_region
    _
  $region41: #{text_encoder_augment.1} parent=0 // pred_fallthru
    _

</llo_original>
